<compile_context>
chip_gen: v7x
topology: tpu7x:2x2x1
jax: 0.10.0
libtpu: 0.0.40
codegen_flags: <defaults>
</compile_context>

<pallas_src>
import functools

import numpy as np
import jax
import jax.numpy as jnp
from jax.experimental import pallas as pl
from jax.experimental.pallas import tpu as pltpu


_VMEM = pl.BlockSpec(memory_space=pltpu.MemorySpace.VMEM)
_SMEM = pl.BlockSpec(memory_space=pltpu.MemorySpace.SMEM)


# ----------------------------------------------------------------------------
# Fused h|q encoder kernel (one launch per episode)
# ----------------------------------------------------------------------------
def _make_hq_kernel(x_dim, n_layers):
    """Fused h|q encoder.

    Layer 0: VPU FMAs (contraction dim = x_dim is tiny), layers 1..L-2:
    128-lane block-diagonal matmul + bias + per-column PReLU, last layer:
    matmul + bias.  Params per layer: W, b, [alpha_row].
    """

    def kernel(x_ref, *refs):
        out_ref = refs[-1]
        prefs = refs[:-1]
        x = x_ref[...]

        # Layer 0: tiny contraction dim -> broadcast multiply-adds on the VPU
        # instead of a mostly-empty MXU pass.
        w = prefs[0][...]
        b = prefs[1][...]
        a = prefs[2][...]
        h = x[:, 0:1] * w[0:1, :]
        for d in range(1, x_dim):
            h = h + x[:, d:d + 1] * w[d:d + 1, :]
        h = h + b
        h = jnp.where(h > 0, h, a * h)

        idx = 3
        for _ in range(1, n_layers - 1):
            w = prefs[idx][...]
            b = prefs[idx + 1][...]
            a = prefs[idx + 2][...]
            idx += 3
            h = jnp.dot(h, w, preferred_element_type=jnp.float32) + b
            h = jnp.where(h > 0, h, a * h)

        w = prefs[idx][...]
        b = prefs[idx + 1][...]
        out_ref[...] = jnp.dot(h, w, preferred_element_type=jnp.float32) + b

    return kernel


@functools.lru_cache(maxsize=None)
def _build_hq_call(m, x_dim, n_layers, out_dim):
    kernel = _make_hq_kernel(x_dim, n_layers)
    n_params = 3 * (n_layers - 1) + 2
    call = pl.pallas_call(
        kernel,
        out_shape=jax.ShapeDtypeStruct((m, out_dim), jnp.float32),
        in_specs=[_VMEM] * (1 + n_params),
        out_specs=_VMEM,
    )
    return jax.jit(call)


# ----------------------------------------------------------------------------
# Fused per-step scorer kernel (one launch per forward step)
# ----------------------------------------------------------------------------
def _make_score_kernel(B, K, h_dim, g_dim, H, g_specs, n_gw, n_gb, n_fw, n_fb):
    n_cand = K + 1

    def kernel(x_ref, q_ref, m1_ref, s_ref, t2_ref, ga_ref, fa_ref, *refs):
        out_ref = refs[-1]
        prefs = refs[:-1]
        o = 0
        gw = prefs[o:o + n_gw]; o += n_gw
        gb = prefs[o:o + n_gb]; o += n_gb
        fw = prefs[o:o + n_fw]; o += n_fw
        fb = prefs[o:o + n_fb]

        # Build the g-MLP input rows ([Hs_bj ; Hs_bj + h_n ; h_n] per batch)
        # with a single 0/1 selection matmul — keeps everything 2-D / on MXU.
        g_in = jnp.dot(m1_ref[...], x_ref[...],
                       preferred_element_type=jnp.float32)

        # g MLP on all 2K+1 distinct rows at once.
        z = g_in
        bi = 0
        ai = 0
        for li, (has_bias, has_prelu) in enumerate(g_specs):
            z = jnp.dot(z, gw[li][...], preferred_element_type=jnp.float32)
            if has_bias:
                z = z + gb[bi][...]
                bi += 1
            if has_prelu:
                a = ga_ref[ai]            # scalar PReLU alpha from SMEM
                ai += 1
                z = jnp.where(z > 0, z, a * z)

        # All K+1 candidate cluster sums in one matmul:
        #   k <  K : sum_j g(Hs_j) - g(Hs_k) + g(Hs_k + h_n)
        #   k == K : sum_j g(Hs_j) + g(h_n)
        Gk = jnp.dot(s_ref[...], z, preferred_element_type=jnp.float32)  # [B*(K+1), g]

        # f MLP; first layer as the exact split  uu @ W1 = Gk@W1g + Q@W1q + b1,
        # Q contribution computed once per batch row and broadcast via T2.
        z = jnp.dot(Gk, fw[0][...], preferred_element_type=jnp.float32)
        qc = jnp.dot(q_ref[...], fw[1][...],
                     preferred_element_type=jnp.float32) + fb[0][...]
        z = z + jnp.dot(t2_ref[...], qc, preferred_element_type=jnp.float32)
        a = fa_ref[0]
        z = jnp.where(z > 0, z, a * z)

        for li in range(1, n_fw - 2):
            z = jnp.dot(z, fw[li + 1][...],
                        preferred_element_type=jnp.float32) + fb[li][...]
            a = fa_ref[li]
            z = jnp.where(z > 0, z, a * z)

        # Last f layer ([H, 1], no bias) as an in-register lane reduction so
        # the kernel writes a single [B, K+1] slab, followed by log-softmax.
        wlt = fw[n_fw - 1][...]                       # [1, H]
        z3 = z.reshape(B, n_cand, H)
        logits = jnp.sum(z3 * wlt[None, :, :], axis=-1)   # [B, K+1]
        mx = jnp.max(logits, axis=-1, keepdims=True)
        lse = jnp.log(jnp.sum(jnp.exp(logits - mx), axis=-1, keepdims=True))
        out_ref[...] = logits - mx - lse

    return kernel


@functools.lru_cache(maxsize=None)
def _build_score_call(B, K, h_dim, g_dim, H, g_specs, n_gw, n_gb, n_fw, n_fb):
    kernel = _make_score_kernel(B, K, h_dim, g_dim, H, g_specs,
                                n_gw, n_gb, n_fw, n_fb)
    n_vmem_params = n_gw + n_gb + n_fw + n_fb
    in_specs = [_VMEM] * 5 + [_SMEM] * 2 + [_VMEM] * n_vmem_params
    call = pl.pallas_call(
        kernel,
        out_shape=jax.ShapeDtypeStruct((B, K + 1), jnp.float32),
        in_specs=in_specs,
        out_specs=_VMEM,
    )
    return jax.jit(call)


@functools.lru_cache(maxsize=None)
def _selection_mats(B, K):
    """0/1 matrices encoding the candidate-cluster bookkeeping as matmuls."""
    BK = B * K
    n_in = BK + B          # rows of X = [Hs rows ; h_n rows]
    n_g = 2 * BK + B       # rows fed to the g MLP
    n_out = B * (K + 1)    # candidate rows
    M1 = np.zeros((n_g, n_in), np.float32)
    S = np.zeros((n_out, n_g), np.float32)
    T2 = np.zeros((n_out, B), np.float32)
    for b in range(B):
        for j in range(K):
            r = b * K + j
            M1[r, r] = 1.0                    # g input row: Hs[b, j]
            M1[BK + r, r] = 1.0               # g input row: Hs[b, j] + h_n[b]
            M1[BK + r, BK + b] = 1.0
        M1[2 * BK + b, BK + b] = 1.0          # g input row: h_n[b]
        for k in range(K + 1):
            o = b * (K + 1) + k
            T2[o, b] = 1.0
            if k < K:
                for j in range(K):
                    if j != k:
                        S[o, b * K + j] = 1.0
                S[o, BK + b * K + k] = 1.0
            else:
                for j in range(K):
                    S[o, b * K + j] = 1.0
                S[o, 2 * BK + b] = 1.0
    return jnp.asarray(M1), jnp.asarray(S), jnp.asarray(T2)


# ----------------------------------------------------------------------------
# Deterministic parameter construction
# ----------------------------------------------------------------------------
def init_mlp(key, dims, final_bias=True, final_act=False):
    """MLP: Linear+PReLU for all but the last layer.  dims: [d0, ..., dL]."""
    weights, biases, alphas, specs = [], [], [], []
    n_layers = len(dims) - 1
    for i in range(n_layers):
        is_last = i == n_layers - 1
        has_bias = final_bias if is_last else True
        has_prelu = final_act if is_last else True
        din, dout = dims[i], dims[i + 1]
        key, kw = jax.random.split(key)
        scale = 1.0 / np.sqrt(din)
        weights.append(jax.random.normal(kw, (din, dout), jnp.float32) * scale)
        if has_bias:
            key, kb = jax.random.split(key)
            biases.append(jax.random.normal(kb, (1, dout), jnp.float32) * scale)
        if has_prelu:
            alphas.append(0.25)   # PyTorch PReLU default init
        specs.append((has_bias, has_prelu))
    return {
        "specs": tuple(specs),
        "weights": weights,
        "biases": biases,
        "alphas": jnp.asarray(alphas, jnp.float32) if alphas
        else jnp.zeros((1,), jnp.float32),
        "out_dim": dims[-1],
    }


def fuse_hq(h_mlp, q_mlp):
    """Build the 128-lane fused (block-diagonal) h|q encoder parameters."""
    Wc, bc, ac = [], [], []
    L = len(h_mlp["weights"])
    for i in range(L):
        wh, wq = h_mlp["weights"][i], q_mlp["weights"][i]
        bh, bq = h_mlp["biases"][i], q_mlp["biases"][i]
        if i == 0:
            w = jnp.concatenate([wh, wq], axis=1)            # [x_dim, 2H]
        else:
            din, dout = wh.shape
            w = jnp.zeros((2 * din, 2 * dout), jnp.float32)
            w = w.at[:din, :dout].set(wh)
            w = w.at[din:, dout:].set(wq)
        Wc.append(w)
        bc.append(jnp.concatenate([bh, bq], axis=1))
        if i < L - 1:
            dout = wh.shape[1]
            ac.append(jnp.concatenate(
                [jnp.full((1, dout), h_mlp["alphas"][i], jnp.float32),
                 jnp.full((1, dout), q_mlp["alphas"][i], jnp.float32)], axis=1))
    return Wc, bc, ac


def relabel(cs):
    cs = np.asarray(cs)
    out = np.zeros_like(cs)
    mapping = {}
    nxt = 0
    for i, c in enumerate(cs.tolist()):
        if c not in mapping:
            mapping[c] = nxt
            nxt += 1
        out[i] = mapping[c]
    return out


# ----------------------------------------------------------------------------
# NeuralClustering_old (Gauss2D path)
# ----------------------------------------------------------------------------
class NeuralClusteringOld:
    def __init__(self, params, key):
        assert params["dataset_name"] == "Gauss2D"
        self.params = params
        self.previous_n = 0
        self.previous_K = 1
        self.x_dim = params["x_dim"]
        self.h_dim = params["h_dim"]
        self.g_dim = params["g_dim"]
        self.H = params["H_dim"]
        H = self.H

        k_h, k_q, k_g, k_f = jax.random.split(key, 4)
        # Mixture_Gaussian_encoder: x_dim -> H x4 -> h_dim   (for h and q)
        self._h_mlp = init_mlp(k_h, [self.x_dim, H, H, H, H, self.h_dim])
        self._q_mlp = init_mlp(k_q, [self.x_dim, H, H, H, H, self.h_dim])
        # g: h_dim -> H x5 -> g_dim
        self._g_mlp = init_mlp(k_g, [self.h_dim, H, H, H, H, H, self.g_dim])
        # f: (g_dim + h_dim) -> H x5 -> 1  (last layer has no bias)
        self._f_mlp = init_mlp(
            k_f, [self.g_dim + self.h_dim, H, H, H, H, H, 1], final_bias=False)

        # Fused h|q encoder params (block-diagonal, 128-lane wide).
        self.hq_w, self.hq_b, self.hq_a = fuse_hq(self._h_mlp, self._q_mlp)

        # g params.
        self.g_specs = self._g_mlp["specs"]
        self.g_w = list(self._g_mlp["weights"])
        self.g_b = list(self._g_mlp["biases"])
        self.g_alphas = self._g_mlp["alphas"]           # (5,) SMEM scalars

        # f params: first layer split into Gk-/Q- halves, last layer transposed
        # so its application is a lane reduction.
        fw = self._f_mlp["weights"]
        self.f_w = ([fw[0][: self.g_dim, :], fw[0][self.g_dim:, :]]
                    + list(fw[1:-1]) + [fw[-1].T])
        self.f_b = list(self._f_mlp["biases"])
        self.f_alphas = self._f_mlp["alphas"]           # (5,) SMEM scalars

    # ---- fused h|q encoder: one Pallas launch per episode ----
    def _encode(self, x_flat):
        flat = []
        L = len(self.hq_w)
        for i in range(L):
            flat.append(self.hq_w[i])
            flat.append(self.hq_b[i])
            if i < L - 1:
                flat.append(self.hq_a[i])
        call = _build_hq_call(x_flat.shape[0], self.x_dim, L,
                              self.hq_w[-1].shape[1])
        return call(x_flat.astype(jnp.float32), *flat)

    # ---- fused scorer: one Pallas launch per forward step ----
    def _score(self, K, hn):
        B = self.batch_size
        X = jnp.concatenate([self.Hs.reshape(B * K, self.h_dim), hn], axis=0)
        M1, S, T2 = _selection_mats(B, K)
        call = _build_score_call(
            B, K, self.h_dim, self.g_dim, self.H, self.g_specs,
            len(self.g_w), len(self.g_b), len(self.f_w), len(self.f_b))
        return call(X, self.Q, M1, S, T2, self.g_alphas, self.f_alphas,
                    *self.g_w, *self.g_b, *self.f_w, *self.f_b)

    def forward(self, data, cs, n):
        assert n == self.previous_n + 1
        self.previous_n = self.previous_n + 1
        cs = np.asarray(cs)
        K = len(set(cs[:n].tolist()))

        if n == 1:
            self.batch_size = data.shape[0]
            self.N = data.shape[1]
            assert (cs == relabel(cs)).all()
            data_flat = data.reshape(self.batch_size * self.N, self.x_dim)
            hq = self._encode(data_flat).reshape(
                self.batch_size, self.N, 2 * self.h_dim)
            self.hs = hq[:, :, : self.h_dim]
            self.qs = hq[:, :, self.h_dim:]
            self.Hs = jnp.zeros((self.batch_size, 1, self.h_dim), jnp.float32)
            self.Hs = self.Hs.at[:, 0, :].set(self.hs[:, 0, :])
            # NOTE: mirrors the original module exactly — Q skips indices 0 AND 1.
            self.Q = self.qs[:, 2:].sum(axis=1)
        else:
            if K == self.previous_K:
                self.Hs = self.Hs.at[:, int(cs[n - 1]), :].add(self.hs[:, n - 1, :])
            else:
                self.Hs = jnp.concatenate(
                    (self.Hs, self.hs[:, n - 1, :][:, None, :]), axis=1)
            if n == self.N - 1:
                self.Q = jnp.zeros((self.batch_size, self.h_dim), jnp.float32)
                self.previous_n = 0
            else:
                self.Q = self.Q - self.qs[:, n]

        self.previous_K = K
        assert self.Hs.shape[1] == K

        # Single fused kernel launch produces the full [B, K+1] log-probs.
        return self._score(K, self.hs[:, n, :])


# ----------------------------------------------------------------------------
# Pure-JAX reference (mirrors the original unfused PyTorch algorithm) for the
# in-script correctness check.
# ----------------------------------------------------------------------------
def _ref_mlp(mlp, x):
    h = x
    bi = 0
    ai = 0
    for (has_bias, has_prelu), w in zip(mlp["specs"], mlp["weights"]):
        h = jnp.dot(h, w)
        if has_bias:
            h = h + mlp["biases"][bi]
            bi += 1
        if has_prelu:
            a = mlp["alphas"][ai]
            ai += 1
            h = jnp.where(h > 0, h, a * h)
    return h


class _PureJaxReference:
    def __init__(self, model):
        self.m = model
        self.previous_n = 0
        self.previous_K = 1

    def forward(self, data, cs, n):
        m = self.m
        assert n == self.previous_n + 1
        self.previous_n += 1
        cs = np.asarray(cs)
        K = len(set(cs[:n].tolist()))
        if n == 1:
            self.B, self.N = data.shape[0], data.shape[1]
            flat = data.reshape(self.B * self.N, m.x_dim)
            self.hs = _ref_mlp(m._h_mlp, flat).reshape(self.B, self.N, m.h_dim)
            self.qs = _ref_mlp(m._q_mlp, flat).reshape(self.B, self.N, m.h_dim)
            self.Hs = jnp.zeros((self.B, 1, m.h_dim), jnp.float32)
            self.Hs = self.Hs.at[:, 0, :].set(self.hs[:, 0, :])
            self.Q = self.qs[:, 2:].sum(axis=1)
        else:
            if K == self.previous_K:
                self.Hs = self.Hs.at[:, int(cs[n - 1]), :].add(self.hs[:, n - 1, :])
            else:
                self.Hs = jnp.concatenate(
                    (self.Hs, self.hs[:, n - 1, :][:, None, :]), axis=1)
            if n == self.N - 1:
                self.Q = jnp.zeros((self.B, m.h_dim), jnp.float32)
                self.previous_n = 0
            else:
                self.Q = self.Q - self.qs[:, n]
        self.previous_K = K
        cols = []
        for k in range(K):
            Hs2 = self.Hs.at[:, k, :].add(self.hs[:, n, :]).reshape(self.B * K, m.h_dim)
            Gk = _ref_mlp(m._g_mlp, Hs2).reshape(self.B, K, m.g_dim).sum(axis=1)
            uu = jnp.concatenate([Gk, self.Q], axis=1)
            cols.append(_ref_mlp(m._f_mlp, uu)[:, 0])
        Hs2 = jnp.concatenate(
            [self.Hs, self.hs[:, n, :][:, None, :]], axis=1).reshape(
                self.B * (K + 1), m.h_dim)
        Gk = _ref_mlp(m._g_mlp, Hs2).reshape(self.B, K + 1, m.g_dim).sum(axis=1)
        uu = jnp.concatenate([Gk, self.Q], axis=1)
        cols.append(_ref_mlp(m._f_mlp, uu)[:, 0])
        logits = jnp.stack(cols, axis=1)
        mx = jnp.max(logits, axis=1, keepdims=True)
        return logits - mx - jnp.log(jnp.exp(logits - mx).sum(axis=1, keepdims=True))


# ----------------------------------------------------------------------------
if __name__ == "__main__":
    params = {
        "dataset_name": "Gauss2D",
        "x_dim": 2,
        "h_dim": 32,
        "g_dim": 32,
        "H_dim": 64,
        "device": "tpu",
    }
    B, N = 2, 8

    key = jax.random.PRNGKey(0)
    k_model, k_data = jax.random.split(key)

    model = NeuralClusteringOld(params, k_model)
    reference = _PureJaxReference(model)
    data = jax.random.normal(k_data, (B, N, params["x_dim"]), jnp.float32)
    cs = np.array([0, 0, 1, 0, 1, 2, 1, 0], dtype=np.int32)  # already relabeled

    # n=1 builds hs/qs/Hs/Q (K=1); n=2 exercises the same-K update branch;
    # n=3 exercises the new-cluster (concat) branch with K=2.
    for n in (1, 2, 3):
        lp = jax.block_until_ready(model.forward(data, cs, n))
        lp_ref = jax.block_until_ready(reference.forward(data, cs, n))
        K = len(set(cs[:n].tolist()))
        assert lp.shape == (B, K + 1)
        assert bool(jnp.all(jnp.isfinite(lp)))
        # rows are log-softmax normalized
        np.testing.assert_allclose(np.exp(np.asarray(lp)).sum(axis=1), 1.0, atol=1e-4)
        # fused Pallas path matches the unfused pure-JAX reference
        np.testing.assert_allclose(np.asarray(lp), np.asarray(lp_ref),
                                   atol=5e-3, rtol=5e-3)

    print("KERNEL_OK")
</pallas_src>

<mosaic_0001>
module attributes {stable_mosaic.version = 11 : i64} {
  func.func @kernel(%arg0: memref<16x2xf32, #tpu.memory_space<vmem>>, %arg1: memref<2x128xf32, #tpu.memory_space<vmem>>, %arg2: memref<1x128xf32, #tpu.memory_space<vmem>>, %arg3: memref<1x128xf32, #tpu.memory_space<vmem>>, %arg4: memref<128x128xf32, #tpu.memory_space<vmem>>, %arg5: memref<1x128xf32, #tpu.memory_space<vmem>>, %arg6: memref<1x128xf32, #tpu.memory_space<vmem>>, %arg7: memref<128x128xf32, #tpu.memory_space<vmem>>, %arg8: memref<1x128xf32, #tpu.memory_space<vmem>>, %arg9: memref<1x128xf32, #tpu.memory_space<vmem>>, %arg10: memref<128x128xf32, #tpu.memory_space<vmem>>, %arg11: memref<1x128xf32, #tpu.memory_space<vmem>>, %arg12: memref<1x128xf32, #tpu.memory_space<vmem>>, %arg13: memref<128x64xf32, #tpu.memory_space<vmem>>, %arg14: memref<1x64xf32, #tpu.memory_space<vmem>>, %arg15: memref<16x64xf32, #tpu.memory_space<vmem>>) attributes {dimension_semantics = [], scalar_prefetch = 0 : i64, scratch_operands = 0 : i64, tpu.core_type = #tpu.core_type<tc>} {
    %c0 = arith.constant 0 : index
    %c0_0 = arith.constant 0 : index
    %0 = vector.load %arg0[%c0, %c0_0] : memref<16x2xf32, #tpu.memory_space<vmem>>, vector<16x2xf32>
    %c0_1 = arith.constant 0 : index
    %c0_2 = arith.constant 0 : index
    %1 = vector.load %arg1[%c0_1, %c0_2] : memref<2x128xf32, #tpu.memory_space<vmem>>, vector<2x128xf32>
    %c0_3 = arith.constant 0 : index
    %c0_4 = arith.constant 0 : index
    %2 = vector.load %arg2[%c0_3, %c0_4] : memref<1x128xf32, #tpu.memory_space<vmem>>, vector<1x128xf32>
    %c0_5 = arith.constant 0 : index
    %c0_6 = arith.constant 0 : index
    %3 = vector.load %arg3[%c0_5, %c0_6] : memref<1x128xf32, #tpu.memory_space<vmem>>, vector<1x128xf32>
    %4 = vector.extract_strided_slice %0 {offsets = [0, 0], sizes = [16, 1], strides = [1, 1]} : vector<16x2xf32> to vector<16x1xf32>
    %5 = vector.extract_strided_slice %1 {offsets = [0, 0], sizes = [1, 128], strides = [1, 1]} : vector<2x128xf32> to vector<1x128xf32>
    %6 = vector.broadcast %4 : vector<16x1xf32> to vector<16x128xf32>
    %7 = vector.broadcast %5 : vector<1x128xf32> to vector<16x128xf32>
    %8 = arith.mulf %6, %7 : vector<16x128xf32>
    %9 = vector.extract_strided_slice %0 {offsets = [0, 1], sizes = [16, 1], strides = [1, 1]} : vector<16x2xf32> to vector<16x1xf32>
    %10 = vector.extract_strided_slice %1 {offsets = [1, 0], sizes = [1, 128], strides = [1, 1]} : vector<2x128xf32> to vector<1x128xf32>
    %11 = vector.broadcast %9 : vector<16x1xf32> to vector<16x128xf32>
    %12 = vector.broadcast %10 : vector<1x128xf32> to vector<16x128xf32>
    %13 = arith.mulf %11, %12 : vector<16x128xf32>
    %14 = arith.addf %8, %13 : vector<16x128xf32>
    %15 = vector.broadcast %2 : vector<1x128xf32> to vector<16x128xf32>
    %16 = arith.addf %14, %15 : vector<16x128xf32>
    %cst = arith.constant 0.000000e+00 : f32
    %17 = vector.broadcast %cst : f32 to vector<16x128xf32>
    %18 = arith.cmpf ogt, %16, %17 : vector<16x128xf32>
    %19 = vector.broadcast %3 : vector<1x128xf32> to vector<16x128xf32>
    %20 = arith.mulf %19, %16 : vector<16x128xf32>
    %21 = arith.select %18, %16, %20 : vector<16x128xi1>, vector<16x128xf32>
    %c0_7 = arith.constant 0 : index
    %c0_8 = arith.constant 0 : index
    %22 = vector.load %arg4[%c0_7, %c0_8] : memref<128x128xf32, #tpu.memory_space<vmem>>, vector<128x128xf32>
    %c0_9 = arith.constant 0 : index
    %c0_10 = arith.constant 0 : index
    %23 = vector.load %arg5[%c0_9, %c0_10] : memref<1x128xf32, #tpu.memory_space<vmem>>, vector<1x128xf32>
    %c0_11 = arith.constant 0 : index
    %c0_12 = arith.constant 0 : index
    %24 = vector.load %arg6[%c0_11, %c0_12] : memref<1x128xf32, #tpu.memory_space<vmem>>, vector<1x128xf32>
    %cst_13 = arith.constant dense<0.000000e+00> : vector<16x128xf32>
    %25 = tpu.matmul %21, %22, %cst_13 {dimension_numbers = #tpu.dot_dimension_numbers<[1], [0], [0], [1], [0, 0, 1, 1], [], []>} : vector<16x128xf32>, vector<128x128xf32>, vector<16x128xf32> -> vector<16x128xf32>
    %26 = vector.broadcast %23 : vector<1x128xf32> to vector<16x128xf32>
    %27 = arith.addf %25, %26 : vector<16x128xf32>
    %cst_14 = arith.constant 0.000000e+00 : f32
    %28 = vector.broadcast %cst_14 : f32 to vector<16x128xf32>
    %29 = arith.cmpf ogt, %27, %28 : vector<16x128xf32>
    %30 = vector.broadcast %24 : vector<1x128xf32> to vector<16x128xf32>
    %31 = arith.mulf %30, %27 : vector<16x128xf32>
    %32 = arith.select %29, %27, %31 : vector<16x128xi1>, vector<16x128xf32>
    %c0_15 = arith.constant 0 : index
    %c0_16 = arith.constant 0 : index
    %33 = vector.load %arg7[%c0_15, %c0_16] : memref<128x128xf32, #tpu.memory_space<vmem>>, vector<128x128xf32>
    %c0_17 = arith.constant 0 : index
    %c0_18 = arith.constant 0 : index
    %34 = vector.load %arg8[%c0_17, %c0_18] : memref<1x128xf32, #tpu.memory_space<vmem>>, vector<1x128xf32>
    %c0_19 = arith.constant 0 : index
    %c0_20 = arith.constant 0 : index
    %35 = vector.load %arg9[%c0_19, %c0_20] : memref<1x128xf32, #tpu.memory_space<vmem>>, vector<1x128xf32>
    %cst_21 = arith.constant dense<0.000000e+00> : vector<16x128xf32>
    %36 = tpu.matmul %32, %33, %cst_21 {dimension_numbers = #tpu.dot_dimension_numbers<[1], [0], [0], [1], [0, 0, 1, 1], [], []>} : vector<16x128xf32>, vector<128x128xf32>, vector<16x128xf32> -> vector<16x128xf32>
    %37 = vector.broadcast %34 : vector<1x128xf32> to vector<16x128xf32>
    %38 = arith.addf %36, %37 : vector<16x128xf32>
    %cst_22 = arith.constant 0.000000e+00 : f32
    %39 = vector.broadcast %cst_22 : f32 to vector<16x128xf32>
    %40 = arith.cmpf ogt, %38, %39 : vector<16x128xf32>
    %41 = vector.broadcast %35 : vector<1x128xf32> to vector<16x128xf32>
    %42 = arith.mulf %41, %38 : vector<16x128xf32>
    %43 = arith.select %40, %38, %42 : vector<16x128xi1>, vector<16x128xf32>
    %c0_23 = arith.constant 0 : index
    %c0_24 = arith.constant 0 : index
    %44 = vector.load %arg10[%c0_23, %c0_24] : memref<128x128xf32, #tpu.memory_space<vmem>>, vector<128x128xf32>
    %c0_25 = arith.constant 0 : index
    %c0_26 = arith.constant 0 : index
    %45 = vector.load %arg11[%c0_25, %c0_26] : memref<1x128xf32, #tpu.memory_space<vmem>>, vector<1x128xf32>
    %c0_27 = arith.constant 0 : index
    %c0_28 = arith.constant 0 : index
    %46 = vector.load %arg12[%c0_27, %c0_28] : memref<1x128xf32, #tpu.memory_space<vmem>>, vector<1x128xf32>
    %cst_29 = arith.constant dense<0.000000e+00> : vector<16x128xf32>
    %47 = tpu.matmul %43, %44, %cst_29 {dimension_numbers = #tpu.dot_dimension_numbers<[1], [0], [0], [1], [0, 0, 1, 1], [], []>} : vector<16x128xf32>, vector<128x128xf32>, vector<16x128xf32> -> vector<16x128xf32>
    %48 = vector.broadcast %45 : vector<1x128xf32> to vector<16x128xf32>
    %49 = arith.addf %47, %48 : vector<16x128xf32>
    %cst_30 = arith.constant 0.000000e+00 : f32
    %50 = vector.broadcast %cst_30 : f32 to vector<16x128xf32>
    %51 = arith.cmpf ogt, %49, %50 : vector<16x128xf32>
    %52 = vector.broadcast %46 : vector<1x128xf32> to vector<16x128xf32>
    %53 = arith.mulf %52, %49 : vector<16x128xf32>
    %54 = arith.select %51, %49, %53 : vector<16x128xi1>, vector<16x128xf32>
    %c0_31 = arith.constant 0 : index
    %c0_32 = arith.constant 0 : index
    %55 = vector.load %arg13[%c0_31, %c0_32] : memref<128x64xf32, #tpu.memory_space<vmem>>, vector<128x64xf32>
    %c0_33 = arith.constant 0 : index
    %c0_34 = arith.constant 0 : index
    %56 = vector.load %arg14[%c0_33, %c0_34] : memref<1x64xf32, #tpu.memory_space<vmem>>, vector<1x64xf32>
    %cst_35 = arith.constant dense<0.000000e+00> : vector<16x64xf32>
    %57 = tpu.matmul %54, %55, %cst_35 {dimension_numbers = #tpu.dot_dimension_numbers<[1], [0], [0], [1], [0, 0, 1, 1], [], []>} : vector<16x128xf32>, vector<128x64xf32>, vector<16x64xf32> -> vector<16x64xf32>
    %58 = vector.broadcast %56 : vector<1x64xf32> to vector<16x64xf32>
    %59 = arith.addf %57, %58 : vector<16x64xf32>
    %c0_36 = arith.constant 0 : index
    %c0_37 = arith.constant 0 : index
    %60 = vector.load %arg15[%c0_36, %c0_37] : memref<16x64xf32, #tpu.memory_space<vmem>>, vector<16x64xf32>
    tpu.vector_store %arg15[%c0_36, %c0_37], %59 {strides = array<i32>} : memref<16x64xf32, #tpu.memory_space<vmem>>, vector<16x64xf32>,
    return
  }
}

</mosaic_0001>

<llo_original>
// kernel: tpu_custom_call.1
$region0: #{tpu_custom_call.1}
  #allocation0 [shape = 'u32[]', space=smem, size = 0x4, offset = 0x4, fixed_abs, tag = 'smem constant byte address 0x4 - core index']
  #allocation1 [shape = 'u32[144,128]{1,0:T(1,128)}', space=vmem, size = 0x12000, scoped, tag = 'internal scratch']
  %s0 = inlined_call_operand.vmem [shape: f32[16,2], index: 0, kind: input, shape index: {}]
  %s1 = inlined_call_operand.vmem [shape: f32[2,128], index: 1, kind: input, shape index: {}]
  %s2 = inlined_call_operand.vmem [shape: f32[1,128], index: 2, kind: input, shape index: {}]
  %s3 = inlined_call_operand.vmem [shape: f32[1,128], index: 3, kind: input, shape index: {}]
  %s4 = inlined_call_operand.vmem [shape: f32[128,128], index: 4, kind: input, shape index: {}]
  %s5 = inlined_call_operand.vmem [shape: f32[1,128], index: 5, kind: input, shape index: {}]
  %s6 = inlined_call_operand.vmem [shape: f32[1,128], index: 6, kind: input, shape index: {}]
  %s7 = inlined_call_operand.hbm [shape: f32[128,128], index: 7, kind: input, shape index: {}]
  %s8 = inlined_call_operand.vmem [shape: f32[1,128], index: 8, kind: input, shape index: {}]
  %s9 = inlined_call_operand.vmem [shape: f32[1,128], index: 9, kind: input, shape index: {}]
  %s10 = inlined_call_operand.hbm [shape: f32[128,128], index: 10, kind: input, shape index: {}]
  %s11 = inlined_call_operand.vmem [shape: f32[1,128], index: 11, kind: input, shape index: {}]
  %s12 = inlined_call_operand.vmem [shape: f32[1,128], index: 12, kind: input, shape index: {}]
  %s13 = inlined_call_operand.vmem [shape: f32[128,64], index: 13, kind: input, shape index: {}]
  %s14 = inlined_call_operand.vmem [shape: f32[1,64], index: 14, kind: input, shape index: {}]
  %s15 = inlined_call_operand.hbm [shape: f32[16,64], index: 15, kind: output, shape index: {}]
  %s16 = sld [smem:[#allocation0]]
  $region78: #{tpu_custom_call.1} parent=0
    _
  %s18 = ssub.s32 1, %s16
  %s19 = scalar_select 0, %s18, %s16
  $region1: #{tpu_custom_call.1} parent=0
    #allocation2 [shape = 'u8[65536]{0}', space=vmem, size = 0x10000, scoped, tag = 'input window, operand 7, single buffered']
    #allocation3 [shape = 's32[1]{0}', space=sflag, size = 0x4, scoped, tag = 'scoped memory for tpu_custom_call.1']
    #allocation4 [shape = 's32[1]{0}', space=sflag, size = 0x4, scoped, tag = 'scoped memory for tpu_custom_call.1']
    #allocation5 [shape = 'u8[65536]{0}', space=vmem, size = 0x10000, scoped, tag = 'input window, operand 10, single buffered']
    #allocation6 [shape = 's32[1]{0}', space=sflag, size = 0x4, scoped, tag = 'scoped memory for tpu_custom_call.1']
    #allocation7 [shape = 'u8[8192]{0}', space=vmem, size = 0x2000, scoped, tag = 'output window, operand 0, single buffered']
    %20 = vsyncpa [#allocation3], 0
    %21 = vsyncpa [#allocation6], 0
    %22 = vsyncpa [#allocation4], 0
    // Predicated region
    $region2: #{tpu_custom_call.1} parent=1 // pred_check
      _
    $region3: #{tpu_custom_call.1} parent=1 // pred_check_branch
      %24 = sbr.rel (0) target = $region5
    $region4: #{tpu_custom_call.1} parent=1 // pred_region
      _
    $region5: #{tpu_custom_call.1} parent=1 // pred_fallthru
      _
    // Predicated region
    $region6: #{tpu_custom_call.1} parent=1 // pred_check
      _
    $region7: #{tpu_custom_call.1} parent=1 // pred_check_branch
      %26 = sbr.rel (0) target = $region9
    $region8: #{tpu_custom_call.1} parent=1 // pred_region
      _
    $region9: #{tpu_custom_call.1} parent=1 // pred_fallthru
      _
    // Predicated region
    $region10: #{tpu_custom_call.1} parent=1 // pred_check
      _
    $region11: #{tpu_custom_call.1} parent=1 // pred_check_branch
      %28 = sbr.rel (0) target = $region13
    $region12: #{tpu_custom_call.1} parent=1 // pred_region
      _
    $region13: #{tpu_custom_call.1} parent=1 // pred_fallthru
      _
    // Predicated region
    $region14: #{tpu_custom_call.1} parent=1 // pred_check
      _
    $region15: #{tpu_custom_call.1} parent=1 // pred_check_branch
      %30 = sbr.rel (0) target = $region17
    $region16: #{tpu_custom_call.1} parent=1 // pred_region
      _
    $region17: #{tpu_custom_call.1} parent=1 // pred_fallthru
      _
    // Predicated region
    $region18: #{tpu_custom_call.1} parent=1 // pred_check
      _
    $region19: #{tpu_custom_call.1} parent=1 // pred_check_branch
      %32 = sbr.rel (0) target = $region21
    $region20: #{tpu_custom_call.1} parent=1 // pred_region
      _
    $region21: #{tpu_custom_call.1} parent=1 // pred_fallthru
      _
    // Predicated region
    $region22: #{tpu_custom_call.1} parent=1 // pred_check
      _
    $region23: #{tpu_custom_call.1} parent=1 // pred_check_branch
      %34 = sbr.rel (0) target = $region25
    $region24: #{tpu_custom_call.1} parent=1 // pred_region
      _
    $region25: #{tpu_custom_call.1} parent=1 // pred_fallthru
      _
    // Predicated region
    $region26: #{tpu_custom_call.1} parent=1 // pred_check
      _
    $region27: #{tpu_custom_call.1} parent=1 // pred_check_branch
      %36 = sbr.rel (0) target = $region29
    $region28: #{tpu_custom_call.1} parent=1 // pred_region
      _
    $region29: #{tpu_custom_call.1} parent=1 // pred_fallthru
      _
    // Predicated region
    $region30: #{tpu_custom_call.1} parent=1 // pred_check
      _
    $region31: #{tpu_custom_call.1} parent=1 // pred_check_branch
      %38 = sbr.rel (0) target = $region33
    $region32: #{tpu_custom_call.1} parent=1 // pred_region
      %s40 = ssub.s32 2048, 2048
      %41 = vsyncadd [#allocation3], %s40
      %s42 = sshll.u32 [#allocation2], 4
      %s43 = int_to_ptr.vmem [resolvable:$true] %s42
      %48 = dma.hbm_to_vmem [thread:$0]  %s7, 2048, %s43, [#allocation3], 128, 128, 8
    $region33: #{tpu_custom_call.1} parent=1 // pred_fallthru
      _
    // Predicated region
    $region34: #{tpu_custom_call.1} parent=1 // pred_check
      _
    $region35: #{tpu_custom_call.1} parent=1 // pred_check_branch
      %50 = sbr.rel (0) target = $region37
    $region36: #{tpu_custom_call.1} parent=1 // pred_region
      _
    $region37: #{tpu_custom_call.1} parent=1 // pred_fallthru
      _
    // Predicated region
    $region38: #{tpu_custom_call.1} parent=1 // pred_check
      _
    $region39: #{tpu_custom_call.1} parent=1 // pred_check_branch
      %52 = sbr.rel (0) target = $region41
    $region40: #{tpu_custom_call.1} parent=1 // pred_region
      _
    $region41: #{tpu_custom_call.1} parent=1 // pred_fallthru
      _
    // Predicated region
    $region42: #{tpu_custom_call.1} parent=1 // pred_check
      _
    $region43: #{tpu_custom_call.1} parent=1 // pred_check_branch
      %54 = sbr.rel (0) target = $region45
    $region44: #{tpu_custom_call.1} parent=1 // pred_region
      %s56 = ssub.s32 2048, 2048
      %57 = vsyncadd [#allocation6], %s56
      %s58 = sshll.u32 [#allocation5], 4
      %s59 = int_to_ptr.vmem [resolvable:$true] %s58
      %64 = dma.hbm_to_vmem [thread:$0]  %s10, 2048, %s59, [#allocation6], 128, 128, 8
    $region45: #{tpu_custom_call.1} parent=1 // pred_fallthru
      _
    // Predicated region
    $region46: #{tpu_custom_call.1} parent=1 // pred_check
      _
    $region47: #{tpu_custom_call.1} parent=1 // pred_check_branch
      %66 = sbr.rel (0) target = $region49
    $region48: #{tpu_custom_call.1} parent=1 // pred_region
      _
    $region49: #{tpu_custom_call.1} parent=1 // pred_fallthru
      _
    // Predicated region
    $region50: #{tpu_custom_call.1} parent=1 // pred_check
      _
    $region51: #{tpu_custom_call.1} parent=1 // pred_check_branch
      %68 = sbr.rel (0) target = $region53
    $region52: #{tpu_custom_call.1} parent=1 // pred_region
      _
    $region53: #{tpu_custom_call.1} parent=1 // pred_fallthru
      _
    // Predicated region
    $region54: #{tpu_custom_call.1} parent=1 // pred_check
      _
    $region55: #{tpu_custom_call.1} parent=1 // pred_check_branch
      %70 = sbr.rel (0) target = $region57
    $region56: #{tpu_custom_call.1} parent=1 // pred_region
      _
    $region57: #{tpu_custom_call.1} parent=1 // pred_fallthru
      _
    // Predicated region
    $region58: #{tpu_custom_call.1} parent=1 // pred_check
      _
    $region59: #{tpu_custom_call.1} parent=1 // pred_check_branch
      %72 = sbr.rel (0) target = $region61
    $region60: #{tpu_custom_call.1} parent=1 // pred_region
      _
    $region61: #{tpu_custom_call.1} parent=1 // pred_fallthru
      _
    // Predicated region
    $region62: #{tpu_custom_call.1} parent=1 // pred_check
      _
    $region63: #{tpu_custom_call.1} parent=1 // pred_check_branch
      %74 = sbr.rel (0) target = $region65
    $region64: #{tpu_custom_call.1} parent=1 // pred_region
      %75 = dma.done [#allocation3], 2048
    $region65: #{tpu_custom_call.1} parent=1 // pred_fallthru
      _
    // Predicated region
    $region66: #{tpu_custom_call.1} parent=1 // pred_check
      _
    $region67: #{tpu_custom_call.1} parent=1 // pred_check_branch
      %77 = sbr.rel (0) target = $region69
    $region68: #{tpu_custom_call.1} parent=1 // pred_region
      %78 = dma.done [#allocation6], 2048
    $region69: #{tpu_custom_call.1} parent=1 // pred_fallthru
      _
    %v79 = vld [vmem:[%s0] sm:$0xff]
    %v80 = vld [vmem:[%s0 + $0x8] sm:$0xff]
    %v81 = vld [vmem:[%s1] sm:$0x3]
    %v82 = vld [vmem:[%s2] sm:$0x1]
    %v83 = vld [vmem:[%s3] sm:$0x1]
    %85 = vset.pattern.permute.xlu0 0
    %86 = vperm.xlu0 %85, %v79
    %v87 = vpop.permute.xlu0 %86
    %90 = vset.pattern.permute.xlu0 0
    %91 = vperm.xlu0 %90, %v80
    %v92 = vpop.permute.xlu0 %91
    %v94 = vlaneseq
    %v95 = vshrl.u32 %v94, 7
    %v96 = vsub.s32 0, %v95
    %v97 = vrot.slane %v81, %v96
    %v98 = vmul.f32 %v87, %v97
    %v99 = vmul.f32 %v92, %v97
    %100 = vset.pattern.permute.xlu0 1
    %101 = vperm.xlu0 %100, %v79
    %v102 = vpop.permute.xlu0 %101
    %104 = vset.pattern.permute.xlu0 1
    %105 = vperm.xlu0 %104, %v80
    %v106 = vpop.permute.xlu0 %105
    %v108 = vlaneseq
    %v109 = vshrl.u32 %v108, 7
    %v110 = vsub.s32 1, %v109
    %v111 = vrot.slane %v81, %v110
    %v112 = vmul.f32 %v102, %v111
    %v113 = vmul.f32 %v106, %v111
    %v114 = vadd.f32 %v98, %v112
    %v115 = vadd.f32 %v99, %v113
    %v117 = vlaneseq
    %v118 = vshrl.u32 %v117, 7
    %v119 = vsub.s32 0, %v118
    %v120 = vrot.slane %v82, %v119
    %v122 = vadd.f32 %v114, %v120
    %v123 = vadd.f32 %v115, %v120
    %vm124 = vcmp.gt.f32.partialorder %v122, 0.0
    %vm125 = vcmp.gt.f32.partialorder %v123, 0.0
    %v127 = vlaneseq
    %v128 = vshrl.u32 %v127, 7
    %v129 = vsub.s32 0, %v128
    %v130 = vrot.slane %v83, %v129
    %v132 = vmul.f32 %v130, %v122
    %v133 = vmul.f32 %v130, %v123
    %v134 = vsel %vm124, %v122, %v132
    %v135 = vsel %vm125, %v123, %v133
    %v136 = vld [vmem:[%s4] sm:$0xff]
    %v137 = vld [vmem:[%s4 + $0x8] sm:$0xff]
    %v138 = vld [vmem:[%s4 + $0x10] sm:$0xff]
    %v139 = vld [vmem:[%s4 + $0x18] sm:$0xff]
    %v140 = vld [vmem:[%s4 + $0x20] sm:$0xff]
    %v141 = vld [vmem:[%s4 + $0x28] sm:$0xff]
    %v142 = vld [vmem:[%s4 + $0x30] sm:$0xff]
    %v143 = vld [vmem:[%s4 + $0x38] sm:$0xff]
    %v144 = vld [vmem:[%s4 + $0x40] sm:$0xff]
    %v145 = vld [vmem:[%s4 + $0x48] sm:$0xff]
    %v146 = vld [vmem:[%s4 + $0x50] sm:$0xff]
    %v147 = vld [vmem:[%s4 + $0x58] sm:$0xff]
    %v148 = vld [vmem:[%s4 + $0x60] sm:$0xff]
    %v149 = vld [vmem:[%s4 + $0x68] sm:$0xff]
    %v150 = vld [vmem:[%s4 + $0x70] sm:$0xff]
    %v151 = vld [vmem:[%s4 + $0x78] sm:$0xff]
    %v152 = vld [vmem:[%s5] sm:$0x1]
    %v153 = vld [vmem:[%s6] sm:$0x1]
    %v155 = vlaneseq
    %v156 = vshrl.u32 %v155, 7
    %v157 = vsub.s32 0, %v156
    %v158 = vrot.slane %v152, %v157
    %160 = vmatprep.subr.mxu0 0.0
    %161 = vmatpush1.msra.mxu0 %v136
    %162 = vmatprep.subr.mxu0 0.0
    %163 = vmatpush1.msra.mxu0 %v137
    %164 = vmatprep.subr.mxu0 0.0
    %165 = vmatpush1.msra.mxu0 %v138
    %166 = vmatprep.subr.mxu0 0.0
    %167 = vmatpush1.msra.mxu0 %v139
    %168 = vmatprep.subr.mxu0 0.0
    %169 = vmatpush1.msra.mxu0 %v140
    %170 = vmatprep.subr.mxu0 0.0
    %171 = vmatpush1.msra.mxu0 %v141
    %172 = vmatprep.subr.mxu0 0.0
    %173 = vmatpush1.msra.mxu0 %v142
    %174 = vmatprep.subr.mxu0 0.0
    %175 = vmatpush1.msra.mxu0 %v143
    %176 = vmatprep.subr.mxu0 0.0
    %177 = vmatpush1.msra.mxu0 %v144
    %178 = vmatprep.subr.mxu0 0.0
    %179 = vmatpush1.msra.mxu0 %v145
    %180 = vmatprep.subr.mxu0 0.0
    %181 = vmatpush1.msra.mxu0 %v146
    %182 = vmatprep.subr.mxu0 0.0
    %183 = vmatpush1.msra.mxu0 %v147
    %184 = vmatprep.subr.mxu0 0.0
    %185 = vmatpush1.msra.mxu0 %v148
    %186 = vmatprep.subr.mxu0 0.0
    %187 = vmatpush1.msra.mxu0 %v149
    %188 = vmatprep.subr.mxu0 0.0
    %189 = vmatpush1.msra.mxu0 %v150
    %190 = vmatprep.subr.mxu0 0.0
    %191 = vmatpush1.msra.mxu0 %v151
    %192 = vmatprep.subr.mxu0 0.0
    %193 = vmatpush1.msra.mxu0 0.0
    %194 = vmatprep.subr.mxu0 0.0
    %195 = vmatpush1.msra.mxu0 0.0
    %196 = vmatprep.subr.mxu0 0.0
    %197 = vmatpush1.msra.mxu0 0.0
    %198 = vmatprep.subr.mxu0 0.0
    %199 = vmatpush1.msra.mxu0 0.0
    %200 = vmatprep.subr.mxu0 0.0
    %201 = vmatpush1.msra.mxu0 0.0
    %202 = vmatprep.subr.mxu0 0.0
    %203 = vmatpush1.msra.mxu0 0.0
    %204 = vmatprep.subr.mxu0 0.0
    %205 = vmatpush1.msra.mxu0 0.0
    %206 = vmatprep.subr.mxu0 0.0
    %207 = vmatpush1.msra.mxu0 0.0
    %208 = vmatprep.subr.mxu0 0.0
    %209 = vmatpush1.msra.mxu0 0.0
    %210 = vmatprep.subr.mxu0 0.0
    %211 = vmatpush1.msra.mxu0 0.0
    %212 = vmatprep.subr.mxu0 0.0
    %213 = vmatpush1.msra.mxu0 0.0
    %214 = vmatprep.subr.mxu0 0.0
    %215 = vmatpush1.msra.mxu0 0.0
    %216 = vmatprep.subr.mxu0 0.0
    %217 = vmatpush1.msra.mxu0 0.0
    %218 = vmatprep.subr.mxu0 0.0
    %219 = vmatpush1.msra.mxu0 0.0
    %220 = vmatprep.subr.mxu0 0.0
    %221 = vmatpush1.msra.mxu0 0.0
    %222 = vmatprep.subr.mxu0 0.0
    %223 = vmatpush1.msra.mxu0 0.0
    %224 = vmatprep.mubr.f32.mxu0 0.0
    %225 = vmatmul.mubr.f32.gmra.mrb[0].mxu0 %v134
    %v226 = vpop.f32.mrb[0].mxu0
    %v227 = vadd.f32 %v158, %v226
    %v228 = vpop.f32.mrb[0].mxu0
    %229 = vmatprep.mubr.f32.mxu0 0.0
    %230 = vmatmul.mubr.f32.gmra.mrb[0].mxu0 %v135
    %v231 = vpop.f32.mrb[0].mxu0
    %v232 = vadd.f32 %v158, %v231
    %v233 = vpop.f32.mrb[0].mxu0
    %234 = vdwg.mxu0
    %vm235 = vcmp.gt.f32.partialorder %v227, 0.0
    %vm236 = vcmp.gt.f32.partialorder %v232, 0.0
    %v238 = vlaneseq
    %v239 = vshrl.u32 %v238, 7
    %v240 = vsub.s32 0, %v239
    %v241 = vrot.slane %v153, %v240
    %v243 = vmul.f32 %v241, %v227
    %v244 = vmul.f32 %v241, %v232
    %v245 = vsel %vm235, %v227, %v243
    %v246 = vsel %vm236, %v232, %v244
    %v247 = vld [vmem:[#allocation2] sm:$0xff]
    %v248 = vld [vmem:[#allocation2 + $0x8] sm:$0xff]
    %v249 = vld [vmem:[#allocation2 + $0x10] sm:$0xff]
    %v250 = vld [vmem:[#allocation2 + $0x18] sm:$0xff]
    %v251 = vld [vmem:[#allocation2 + $0x20] sm:$0xff]
    %v252 = vld [vmem:[#allocation2 + $0x28] sm:$0xff]
    %v253 = vld [vmem:[#allocation2 + $0x30] sm:$0xff]
    %v254 = vld [vmem:[#allocation2 + $0x38] sm:$0xff]
    %v255 = vld [vmem:[#allocation2 + $0x40] sm:$0xff]
    %v256 = vld [vmem:[#allocation2 + $0x48] sm:$0xff]
    %v257 = vld [vmem:[#allocation2 + $0x50] sm:$0xff]
    %v258 = vld [vmem:[#allocation2 + $0x58] sm:$0xff]
    %v259 = vld [vmem:[#allocation2 + $0x60] sm:$0xff]
    %v260 = vld [vmem:[#allocation2 + $0x68] sm:$0xff]
    %v261 = vld [vmem:[#allocation2 + $0x70] sm:$0xff]
    %v262 = vld [vmem:[#allocation2 + $0x78] sm:$0xff]
    %v263 = vld [vmem:[%s8] sm:$0x1]
    %v264 = vld [vmem:[%s9] sm:$0x1]
    %v266 = vlaneseq
    %v267 = vshrl.u32 %v266, 7
    %v268 = vsub.s32 0, %v267
    %v269 = vrot.slane %v263, %v268
    %271 = vmatprep.subr.mxu0 0.0
    %272 = vmatpush1.msra.mxu0 %v247
    %273 = vmatprep.subr.mxu0 0.0
    %274 = vmatpush1.msra.mxu0 %v248
    %275 = vmatprep.subr.mxu0 0.0
    %276 = vmatpush1.msra.mxu0 %v249
    %277 = vmatprep.subr.mxu0 0.0
    %278 = vmatpush1.msra.mxu0 %v250
    %279 = vmatprep.subr.mxu0 0.0
    %280 = vmatpush1.msra.mxu0 %v251
    %281 = vmatprep.subr.mxu0 0.0
    %282 = vmatpush1.msra.mxu0 %v252
    %283 = vmatprep.subr.mxu0 0.0
    %284 = vmatpush1.msra.mxu0 %v253
    %285 = vmatprep.subr.mxu0 0.0
    %286 = vmatpush1.msra.mxu0 %v254
    %287 = vmatprep.subr.mxu0 0.0
    %288 = vmatpush1.msra.mxu0 %v255
    %289 = vmatprep.subr.mxu0 0.0
    %290 = vmatpush1.msra.mxu0 %v256
    %291 = vmatprep.subr.mxu0 0.0
    %292 = vmatpush1.msra.mxu0 %v257
    %293 = vmatprep.subr.mxu0 0.0
    %294 = vmatpush1.msra.mxu0 %v258
    %295 = vmatprep.subr.mxu0 0.0
    %296 = vmatpush1.msra.mxu0 %v259
    %297 = vmatprep.subr.mxu0 0.0
    %298 = vmatpush1.msra.mxu0 %v260
    %299 = vmatprep.subr.mxu0 0.0
    %300 = vmatpush1.msra.mxu0 %v261
    %301 = vmatprep.subr.mxu0 0.0
    %302 = vmatpush1.msra.mxu0 %v262
    %303 = vmatprep.subr.mxu0 0.0
    %304 = vmatpush1.msra.mxu0 0.0
    %305 = vmatprep.subr.mxu0 0.0
    %306 = vmatpush1.msra.mxu0 0.0
    %307 = vmatprep.subr.mxu0 0.0
    %308 = vmatpush1.msra.mxu0 0.0
    %309 = vmatprep.subr.mxu0 0.0
    %310 = vmatpush1.msra.mxu0 0.0
    %311 = vmatprep.subr.mxu0 0.0
    %312 = vmatpush1.msra.mxu0 0.0
    %313 = vmatprep.subr.mxu0 0.0
    %314 = vmatpush1.msra.mxu0 0.0
    %315 = vmatprep.subr.mxu0 0.0
    %316 = vmatpush1.msra.mxu0 0.0
    %317 = vmatprep.subr.mxu0 0.0
    %318 = vmatpush1.msra.mxu0 0.0
    %319 = vmatprep.subr.mxu0 0.0
    %320 = vmatpush1.msra.mxu0 0.0
    %321 = vmatprep.subr.mxu0 0.0
    %322 = vmatpush1.msra.mxu0 0.0
    %323 = vmatprep.subr.mxu0 0.0
    %324 = vmatpush1.msra.mxu0 0.0
    %325 = vmatprep.subr.mxu0 0.0
    %326 = vmatpush1.msra.mxu0 0.0
    %327 = vmatprep.subr.mxu0 0.0
    %328 = vmatpush1.msra.mxu0 0.0
    %329 = vmatprep.subr.mxu0 0.0
    %330 = vmatpush1.msra.mxu0 0.0
    %331 = vmatprep.subr.mxu0 0.0
    %332 = vmatpush1.msra.mxu0 0.0
    %333 = vmatprep.subr.mxu0 0.0
    %334 = vmatpush1.msra.mxu0 0.0
    %335 = vmatprep.mubr.f32.mxu0 0.0
    %336 = vmatmul.mubr.f32.gmra.mrb[0].mxu0 %v245
    %v337 = vpop.f32.mrb[0].mxu0
    %v338 = vadd.f32 %v269, %v337
    %v339 = vpop.f32.mrb[0].mxu0
    %340 = vmatprep.mubr.f32.mxu0 0.0
    %341 = vmatmul.mubr.f32.gmra.mrb[0].mxu0 %v246
    %v342 = vpop.f32.mrb[0].mxu0
    %v343 = vadd.f32 %v269, %v342
    %v344 = vpop.f32.mrb[0].mxu0
    %345 = vdwg.mxu0
    %vm346 = vcmp.gt.f32.partialorder %v338, 0.0
    %vm347 = vcmp.gt.f32.partialorder %v343, 0.0
    %v349 = vlaneseq
    %v350 = vshrl.u32 %v349, 7
    %v351 = vsub.s32 0, %v350
    %v352 = vrot.slane %v264, %v351
    %v354 = vmul.f32 %v352, %v338
    %v355 = vmul.f32 %v352, %v343
    %v356 = vsel %vm346, %v338, %v354
    %v357 = vsel %vm347, %v343, %v355
    %v358 = vld [vmem:[#allocation5] sm:$0xff]
    %v359 = vld [vmem:[#allocation5 + $0x8] sm:$0xff]
    %v360 = vld [vmem:[#allocation5 + $0x10] sm:$0xff]
    %v361 = vld [vmem:[#allocation5 + $0x18] sm:$0xff]
    %v362 = vld [vmem:[#allocation5 + $0x20] sm:$0xff]
    %v363 = vld [vmem:[#allocation5 + $0x28] sm:$0xff]
    %v364 = vld [vmem:[#allocation5 + $0x30] sm:$0xff]
    %v365 = vld [vmem:[#allocation5 + $0x38] sm:$0xff]
    %v366 = vld [vmem:[#allocation5 + $0x40] sm:$0xff]
    %v367 = vld [vmem:[#allocation5 + $0x48] sm:$0xff]
    %v368 = vld [vmem:[#allocation5 + $0x50] sm:$0xff]
    %v369 = vld [vmem:[#allocation5 + $0x58] sm:$0xff]
    %v370 = vld [vmem:[#allocation5 + $0x60] sm:$0xff]
    %v371 = vld [vmem:[#allocation5 + $0x68] sm:$0xff]
    %v372 = vld [vmem:[#allocation5 + $0x70] sm:$0xff]
    %v373 = vld [vmem:[#allocation5 + $0x78] sm:$0xff]
    %v374 = vld [vmem:[%s11] sm:$0x1]
    %v375 = vld [vmem:[%s12] sm:$0x1]
    %v377 = vlaneseq
    %v378 = vshrl.u32 %v377, 7
    %v379 = vsub.s32 0, %v378
    %v380 = vrot.slane %v374, %v379
    %382 = vmatprep.subr.mxu0 0.0
    %383 = vmatpush1.msra.mxu0 %v358
    %384 = vmatprep.subr.mxu0 0.0
    %385 = vmatpush1.msra.mxu0 %v359
    %386 = vmatprep.subr.mxu0 0.0
    %387 = vmatpush1.msra.mxu0 %v360
    %388 = vmatprep.subr.mxu0 0.0
    %389 = vmatpush1.msra.mxu0 %v361
    %390 = vmatprep.subr.mxu0 0.0
    %391 = vmatpush1.msra.mxu0 %v362
    %392 = vmatprep.subr.mxu0 0.0
    %393 = vmatpush1.msra.mxu0 %v363
    %394 = vmatprep.subr.mxu0 0.0
    %395 = vmatpush1.msra.mxu0 %v364
    %396 = vmatprep.subr.mxu0 0.0
    %397 = vmatpush1.msra.mxu0 %v365
    %398 = vmatprep.subr.mxu0 0.0
    %399 = vmatpush1.msra.mxu0 %v366
    %400 = vmatprep.subr.mxu0 0.0
    %401 = vmatpush1.msra.mxu0 %v367
    %402 = vmatprep.subr.mxu0 0.0
    %403 = vmatpush1.msra.mxu0 %v368
    %404 = vmatprep.subr.mxu0 0.0
    %405 = vmatpush1.msra.mxu0 %v369
    %406 = vmatprep.subr.mxu0 0.0
    %407 = vmatpush1.msra.mxu0 %v370
    %408 = vmatprep.subr.mxu0 0.0
    %409 = vmatpush1.msra.mxu0 %v371
    %410 = vmatprep.subr.mxu0 0.0
    %411 = vmatpush1.msra.mxu0 %v372
    %412 = vmatprep.subr.mxu0 0.0
    %413 = vmatpush1.msra.mxu0 %v373
    %414 = vmatprep.subr.mxu0 0.0
    %415 = vmatpush1.msra.mxu0 0.0
    %416 = vmatprep.subr.mxu0 0.0
    %417 = vmatpush1.msra.mxu0 0.0
    %418 = vmatprep.subr.mxu0 0.0
    %419 = vmatpush1.msra.mxu0 0.0
    %420 = vmatprep.subr.mxu0 0.0
    %421 = vmatpush1.msra.mxu0 0.0
    %422 = vmatprep.subr.mxu0 0.0
    %423 = vmatpush1.msra.mxu0 0.0
    %424 = vmatprep.subr.mxu0 0.0
    %425 = vmatpush1.msra.mxu0 0.0
    %426 = vmatprep.subr.mxu0 0.0
    %427 = vmatpush1.msra.mxu0 0.0
    %428 = vmatprep.subr.mxu0 0.0
    %429 = vmatpush1.msra.mxu0 0.0
    %430 = vmatprep.subr.mxu0 0.0
    %431 = vmatpush1.msra.mxu0 0.0
    %432 = vmatprep.subr.mxu0 0.0
    %433 = vmatpush1.msra.mxu0 0.0
    %434 = vmatprep.subr.mxu0 0.0
    %435 = vmatpush1.msra.mxu0 0.0
    %436 = vmatprep.subr.mxu0 0.0
    %437 = vmatpush1.msra.mxu0 0.0
    %438 = vmatprep.subr.mxu0 0.0
    %439 = vmatpush1.msra.mxu0 0.0
    %440 = vmatprep.subr.mxu0 0.0
    %441 = vmatpush1.msra.mxu0 0.0
    %442 = vmatprep.subr.mxu0 0.0
    %443 = vmatpush1.msra.mxu0 0.0
    %444 = vmatprep.subr.mxu0 0.0
    %445 = vmatpush1.msra.mxu0 0.0
    %446 = vmatprep.mubr.f32.mxu0 0.0
    %447 = vmatmul.mubr.f32.gmra.mrb[0].mxu0 %v356
    %v448 = vpop.f32.mrb[0].mxu0
    %v449 = vadd.f32 %v380, %v448
    %v450 = vpop.f32.mrb[0].mxu0
    %451 = vmatprep.mubr.f32.mxu0 0.0
    %452 = vmatmul.mubr.f32.gmra.mrb[0].mxu0 %v357
    %v453 = vpop.f32.mrb[0].mxu0
    %v454 = vadd.f32 %v380, %v453
    %v455 = vpop.f32.mrb[0].mxu0
    %456 = vdwg.mxu0
    %vm457 = vcmp.gt.f32.partialorder %v449, 0.0
    %vm458 = vcmp.gt.f32.partialorder %v454, 0.0
    %v460 = vlaneseq
    %v461 = vshrl.u32 %v460, 7
    %v462 = vsub.s32 0, %v461
    %v463 = vrot.slane %v375, %v462
    %v465 = vmul.f32 %v463, %v449
    %v466 = vmul.f32 %v463, %v454
    %v467 = vsel %vm457, %v449, %v465
    %v468 = vsel %vm458, %v454, %v466
    %v469 = vld [vmem:[%s13] sm:$0xff]
    %v470 = vld [vmem:[%s13 + $0x8] sm:$0xff]
    %v471 = vld [vmem:[%s13 + $0x10] sm:$0xff]
    %v472 = vld [vmem:[%s13 + $0x18] sm:$0xff]
    %v473 = vld [vmem:[%s13 + $0x20] sm:$0xff]
    %v474 = vld [vmem:[%s13 + $0x28] sm:$0xff]
    %v475 = vld [vmem:[%s13 + $0x30] sm:$0xff]
    %v476 = vld [vmem:[%s13 + $0x38] sm:$0xff]
    %v477 = vld [vmem:[%s13 + $0x40] sm:$0xff]
    %v478 = vld [vmem:[%s13 + $0x48] sm:$0xff]
    %v479 = vld [vmem:[%s13 + $0x50] sm:$0xff]
    %v480 = vld [vmem:[%s13 + $0x58] sm:$0xff]
    %v481 = vld [vmem:[%s13 + $0x60] sm:$0xff]
    %v482 = vld [vmem:[%s13 + $0x68] sm:$0xff]
    %v483 = vld [vmem:[%s13 + $0x70] sm:$0xff]
    %v484 = vld [vmem:[%s13 + $0x78] sm:$0xff]
    %v485 = vld [vmem:[%s14] sm:$0x1]
    %v487 = vlaneseq
    %v488 = vshrl.u32 %v487, 7
    %v489 = vsub.s32 0, %v488
    %v490 = vrot.slane %v485, %v489
    %492 = vmatprep.subr.mxu0 0.0
    %493 = vmatpush1.msra.mxu0 %v469
    %494 = vmatprep.subr.mxu0 0.0
    %495 = vmatpush1.msra.mxu0 %v470
    %496 = vmatprep.subr.mxu0 0.0
    %497 = vmatpush1.msra.mxu0 %v471
    %498 = vmatprep.subr.mxu0 0.0
    %499 = vmatpush1.msra.mxu0 %v472
    %500 = vmatprep.subr.mxu0 0.0
    %501 = vmatpush1.msra.mxu0 %v473
    %502 = vmatprep.subr.mxu0 0.0
    %503 = vmatpush1.msra.mxu0 %v474
    %504 = vmatprep.subr.mxu0 0.0
    %505 = vmatpush1.msra.mxu0 %v475
    %506 = vmatprep.subr.mxu0 0.0
    %507 = vmatpush1.msra.mxu0 %v476
    %508 = vmatprep.subr.mxu0 0.0
    %509 = vmatpush1.msra.mxu0 %v477
    %510 = vmatprep.subr.mxu0 0.0
    %511 = vmatpush1.msra.mxu0 %v478
    %512 = vmatprep.subr.mxu0 0.0
    %513 = vmatpush1.msra.mxu0 %v479
    %514 = vmatprep.subr.mxu0 0.0
    %515 = vmatpush1.msra.mxu0 %v480
    %516 = vmatprep.subr.mxu0 0.0
    %517 = vmatpush1.msra.mxu0 %v481
    %518 = vmatprep.subr.mxu0 0.0
    %519 = vmatpush1.msra.mxu0 %v482
    %520 = vmatprep.subr.mxu0 0.0
    %521 = vmatpush1.msra.mxu0 %v483
    %522 = vmatprep.subr.mxu0 0.0
    %523 = vmatpush1.msra.mxu0 %v484
    %524 = vmatprep.subr.mxu0 0.0
    %525 = vmatpush1.msra.mxu0 0.0
    %526 = vmatprep.subr.mxu0 0.0
    %527 = vmatpush1.msra.mxu0 0.0
    %528 = vmatprep.subr.mxu0 0.0
    %529 = vmatpush1.msra.mxu0 0.0
    %530 = vmatprep.subr.mxu0 0.0
    %531 = vmatpush1.msra.mxu0 0.0
    %532 = vmatprep.subr.mxu0 0.0
    %533 = vmatpush1.msra.mxu0 0.0
    %534 = vmatprep.subr.mxu0 0.0
    %535 = vmatpush1.msra.mxu0 0.0
    %536 = vmatprep.subr.mxu0 0.0
    %537 = vmatpush1.msra.mxu0 0.0
    %538 = vmatprep.subr.mxu0 0.0
    %539 = vmatpush1.msra.mxu0 0.0
    %540 = vmatprep.subr.mxu0 0.0
    %541 = vmatpush1.msra.mxu0 0.0
    %542 = vmatprep.subr.mxu0 0.0
    %543 = vmatpush1.msra.mxu0 0.0
    %544 = vmatprep.subr.mxu0 0.0
    %545 = vmatpush1.msra.mxu0 0.0
    %546 = vmatprep.subr.mxu0 0.0
    %547 = vmatpush1.msra.mxu0 0.0
    %548 = vmatprep.subr.mxu0 0.0
    %549 = vmatpush1.msra.mxu0 0.0
    %550 = vmatprep.subr.mxu0 0.0
    %551 = vmatpush1.msra.mxu0 0.0
    %552 = vmatprep.subr.mxu0 0.0
    %553 = vmatpush1.msra.mxu0 0.0
    %554 = vmatprep.subr.mxu0 0.0
    %555 = vmatpush1.msra.mxu0 0.0
    %556 = vmatprep.mubr.f32.mxu0 0.0
    %557 = vmatmul.mubr.f32.gmra.mrb[0].mxu0 %v467
    %v558 = vpop.f32.mrb[0].mxu0
    %v559 = vadd.f32 %v490, %v558
    %v560 = vpop.f32.mrb[0].mxu0
    %561 = vmatprep.mubr.f32.mxu0 0.0
    %562 = vmatmul.mubr.f32.gmra.mrb[0].mxu0 %v468
    %v563 = vpop.f32.mrb[0].mxu0
    %v564 = vadd.f32 %v490, %v563
    %v565 = vpop.f32.mrb[0].mxu0
    %566 = vdwg.mxu0
    %vm567 = vcmask 523264
    %568 = vst.msk [vmem:[#allocation7] sm:$0xff] %vm567, %v559
    %569 = vst.msk [vmem:[#allocation7 + $0x8] sm:$0xff] %vm567, %v564
    // Predicated region
    $region70: #{tpu_custom_call.1} parent=1 // pred_check
      _
    $region71: #{tpu_custom_call.1} parent=1 // pred_check_branch
      %571 = sbr.rel (0) target = $region73
    $region72: #{tpu_custom_call.1} parent=1 // pred_region
      %s573 = ssub.s32 256, 256
      %574 = vsyncadd [#allocation4], %s573
      %s575 = sshll.u32 [#allocation7], 4
      %s576 = int_to_ptr.vmem [resolvable:$true] %s575
      %581 = dma.vmem_to_hbm [thread:$0]  %s576, 256, %s15, [#allocation4], 128, 128, 8
    $region73: #{tpu_custom_call.1} parent=1 // pred_fallthru
      _
    // Predicated region
    $region74: #{tpu_custom_call.1} parent=1 // pred_check
      _
    $region75: #{tpu_custom_call.1} parent=1 // pred_check_branch
      %583 = sbr.rel (0) target = $region77
    $region76: #{tpu_custom_call.1} parent=1 // pred_region
      %584 = dma.done [#allocation4], 256
    $region77: #{tpu_custom_call.1} parent=1 // pred_fallthru
      _
    %585 = vsyncpa [#allocation3], 1
    %586 = vsyncpa [#allocation6], 1
    %587 = vsyncpa [#allocation4], 1

</llo_original>
